<compile_context>
chip_gen: v7x
topology: tpu7x:2x2x1
jax: 0.10.0
libtpu: 0.0.40
codegen_flags: <defaults>
</compile_context>

<pallas_src>
import functools

import jax
import jax.numpy as jnp
from jax import lax
from jax.experimental import pallas as pl
from jax.experimental.pallas import tpu as pltpu


# ---------------------------------------------------------------------------
# Pallas kernel: whole generator forward, fused (3 matmuls + bias/ReLU/tanh)
# ---------------------------------------------------------------------------

def _generator_kernel(z_ref, w1a1_ref, bias1_ref, a2_ref, beta2_ref,
                      a3_ref, beta3_ref, out_ref):
    # [Linear + Upsample(x2) + Conv2d(1,1,3,p=1) + BN(eps=0.8)] folded into w1a1/bias1, then ReLU.
    # Matmul operands in bf16 (weights pre-cast at init), f32 accumulation on the MXU.
    h = jnp.dot(z_ref[...].astype(w1a1_ref.dtype), w1a1_ref[...],
                preferred_element_type=jnp.float32) + bias1_ref[...]
    h = jnp.maximum(h, 0.0)
    # block 2: Upsample(x2) + Conv2d(1,1,3,p=1) + BN folded into a2/beta2, then ReLU.
    h = jnp.dot(h.astype(a2_ref.dtype), a2_ref[...],
                preferred_element_type=jnp.float32) + beta2_ref[...]
    h = jnp.maximum(h, 0.0)
    # head: Conv2d(1, channels, 3, p=1) folded into a3/beta3, then Tanh (single EUP op).
    h = jnp.dot(h.astype(a3_ref.dtype), a3_ref[...],
                preferred_element_type=jnp.float32) + beta3_ref[...]
    out_ref[...] = jnp.tanh(h)


def _round_up(x, m):
    return ((x + m - 1) // m) * m


def _choose_batch_tiling(batch, max_tile=512):
    """Pick (padded_batch, tile_b): big tiles to amortize ~0.35us/step overhead, but
    >= 2 grid steps when the batch allows it (v7x megacore sharding of the parallel axis)."""
    bp = _round_up(max(batch, 1), 8)
    if bp <= 16:
        tile_b = bp                                    # tiny batch: single step
    else:
        tile_b = min(max_tile, _round_up((bp + 1) // 2, 8))
    bp = _round_up(bp, tile_b)
    return bp, tile_b


@functools.partial(jax.jit, static_argnames=("channels", "img_size"))
def generator_forward(z, params, *, channels, img_size):
    B, dz = z.shape
    w1a1, bias1 = params["w1a1"], params["bias1"]
    a2, beta2 = params["a2"], params["beta2"]
    a3, beta3 = params["a3"], params["beta3"]
    n3 = a3.shape[1]                                   # channels * img_size^2 (multiple of 128)

    bp, tile_b = _choose_batch_tiling(B)
    grid = (bp // tile_b,)
    z_pad = z if bp == B else jnp.pad(z, ((0, bp - B), (0, 0)))

    # VMEM budget: single-buffered resident weights + double-buffered z/out tiles, 2x headroom.
    weights = (w1a1, bias1, a2, beta2, a3, beta3)
    weight_bytes = sum(int(p.size) * p.dtype.itemsize for p in weights)
    io_bytes = 2 * tile_b * (dz * z.dtype.itemsize + n3 * 4)
    vmem_limit = int(min(48 << 20, max(16 << 20, 2 * (weight_bytes + io_bytes))))

    def _resident(shape):
        # Grid-invariant weights/biases: keep one resident copy, no double buffer.
        return pl.BlockSpec(shape, lambda *_: (0,) * len(shape),
                            pipeline_mode=pl.Buffered(1))

    out_flat = pl.pallas_call(
        _generator_kernel,
        out_shape=jax.ShapeDtypeStruct((bp, n3), jnp.float32),
        grid=grid,
        in_specs=[
            pl.BlockSpec((tile_b, dz), lambda i: (i, 0)),   # z batch tile
            _resident(w1a1.shape), _resident(bias1.shape),
            _resident(a2.shape), _resident(beta2.shape),
            _resident(a3.shape), _resident(beta3.shape),
        ],
        out_specs=pl.BlockSpec((tile_b, n3), lambda i: (i, 0)),   # lane-dense output slab
        compiler_params=pltpu.CompilerParams(
            dimension_semantics=("parallel",),
            vmem_limit_bytes=vmem_limit,
        ),
    )(z_pad, w1a1, bias1, a2, beta2, a3, beta3)

    # drop batch padding, match PyTorch NCHW output of the final Conv2d / Tanh
    return out_flat[:B].reshape(B, channels, img_size, img_size)


# ---------------------------------------------------------------------------
# Init-time operator folding (exact, one-time; not part of the per-forward hot path)
# ---------------------------------------------------------------------------

def _upsample2_as_matrix(S):
    """[S*S, (2S)*(2S)] nearest-neighbor x2 upsample operator (row-major flatten)."""
    o = jnp.arange(2 * S)
    src = (o[:, None] // 2) * S + (o[None, :] // 2)              # [2S, 2S] source flat index
    return jax.nn.one_hot(src.reshape(-1), S * S, dtype=jnp.float32).T   # [S*S, 4*S*S]


def _conv3x3_as_matrix(w, S):
    """w: [Cout, 1, 3, 3]. Returns M: [S*S, Cout*S*S] with row-major spatial flattening such
    that (x_flat @ M).reshape(Cout, S, S) == Conv2d(x, w, stride=1, padding=1) (no bias)."""
    cout = int(w.shape[0])
    ss = S * S
    oi = jnp.arange(S)
    oj = jnp.arange(S)
    taps = []
    for ki in range(3):
        for kj in range(3):
            ii = oi + ki - 1
            ij = oj + kj - 1
            valid = (((ii >= 0) & (ii < S))[:, None] & ((ij >= 0) & (ij < S))[None, :])
            in_flat = (jnp.clip(ii, 0, S - 1)[:, None] * S + jnp.clip(ij, 0, S - 1)[None, :])
            onehot = jax.nn.one_hot(in_flat.reshape(-1), ss, dtype=jnp.float32)   # [out, in]
            taps.append((onehot * valid.reshape(-1, 1).astype(jnp.float32)).T)    # [in, out]
    cols = []
    for c in range(cout):
        mc = jnp.zeros((ss, ss), jnp.float32)
        t = 0
        for ki in range(3):
            for kj in range(3):
                mc = mc + w[c, 0, ki, kj] * taps[t]
                t += 1
        cols.append(mc)
    return jnp.concatenate(cols, axis=1)   # [ss, cout*ss]


def init_params(key, latent_dim, channels, img_size, matmul_dtype=jnp.bfloat16):
    """Deterministic synthetic parameters matching the module's __init__ shapes,
    plus the folded dense operators consumed by the Pallas kernel."""
    s0 = img_size // 4                      # init_size
    s1 = 2 * s0
    s2 = 4 * s0                             # == img_size
    n0, n1, n2 = s0 * s0, s1 * s1, s2 * s2

    nk = iter(jax.random.split(key, 16)).__next__   # independent key per parameter

    l1_w = jax.random.normal(nk(), (n0, latent_dim), jnp.float32) / jnp.sqrt(latent_dim)
    l1_b = 0.01 * jax.random.normal(nk(), (n0,), jnp.float32)

    def conv_init(cout):
        w = jax.random.normal(nk(), (cout, 1, 3, 3), jnp.float32) / 3.0
        b = 0.01 * jax.random.normal(nk(), (cout,), jnp.float32)
        return w, b

    def bn_fold(eps=0.8):
        gamma = 1.0 + 0.1 * jax.random.normal(nk(), (), jnp.float32)
        beta = 0.05 * jax.random.normal(nk(), (), jnp.float32)
        rmean = 0.1 * jax.random.normal(nk(), (), jnp.float32)
        rvar = jnp.abs(jax.random.normal(nk(), (), jnp.float32)) + 1.0
        s = gamma / jnp.sqrt(rvar + eps)
        t = beta - rmean * s
        return s, t

    c1_w, c1_b = conv_init(1)
    bn1_s, bn1_t = bn_fold()
    c2_w, c2_b = conv_init(1)
    bn2_s, bn2_t = bn_fold()
    c3_w, c3_b = conv_init(channels)

    # Fold Upsample -> Conv -> (eval) BatchNorm of each block into one exact dense operator.
    A1 = bn1_s * (_upsample2_as_matrix(s0) @ _conv3x3_as_matrix(c1_w, s1))   # [n0, n1]
    beta1 = jnp.full((1, n1), bn1_s * c1_b[0] + bn1_t, jnp.float32)
    A2 = bn2_s * (_upsample2_as_matrix(s1) @ _conv3x3_as_matrix(c2_w, s2))   # [n1, n2]
    beta2 = jnp.full((1, n2), bn2_s * c2_b[0] + bn2_t, jnp.float32)
    A3 = _conv3x3_as_matrix(c3_w, s2)                                        # [n2, channels*n2]
    beta3 = jnp.repeat(c3_b, n2).reshape(1, channels * n2)

    # Fold the Linear into block-1 (both affine, no nonlinearity between them).
    W1 = l1_w.T                                                              # [latent_dim, n0]
    W1A1 = W1 @ A1                                                           # [latent_dim, n1]
    bias1 = l1_b.reshape(1, n0) @ A1 + beta1                                 # [1, n1]

    kernel_params = dict(
        w1a1=W1A1.astype(matmul_dtype), bias1=bias1,
        a2=A2.astype(matmul_dtype), beta2=beta2,
        a3=A3.astype(matmul_dtype), beta3=beta3)
    raw_params = dict(
        l1_w=l1_w, l1_b=l1_b,
        c1_w=c1_w, c1_b=c1_b, bn1_s=bn1_s, bn1_t=bn1_t,
        c2_w=c2_w, c2_b=c2_b, bn2_s=bn2_s, bn2_t=bn2_t,
        c3_w=c3_w, c3_b=c3_b)
    return kernel_params, raw_params


# ---------------------------------------------------------------------------
# Pure-JAX reference (direct Upsample / Conv2d / BN / ReLU / Tanh), for validation
# ---------------------------------------------------------------------------

def reference_forward(z, raw, channels, img_size):
    s0 = img_size // 4
    B = z.shape[0]
    x = z @ raw["l1_w"].T + raw["l1_b"]
    x = x.reshape(B, 1, s0, s0)

    def up2(v):
        return jnp.repeat(jnp.repeat(v, 2, axis=2), 2, axis=3)

    def conv(v, w, b):
        y = lax.conv_general_dilated(v, w, window_strides=(1, 1),
                                     padding=((1, 1), (1, 1)),
                                     dimension_numbers=("NCHW", "OIHW", "NCHW"))
        return y + b.reshape(1, -1, 1, 1)

    x = conv(up2(x), raw["c1_w"], raw["c1_b"])
    x = raw["bn1_s"] * x + raw["bn1_t"]
    x = jnp.maximum(x, 0.0)
    x = conv(up2(x), raw["c2_w"], raw["c2_b"])
    x = raw["bn2_s"] * x + raw["bn2_t"]
    x = jnp.maximum(x, 0.0)
    x = conv(x, raw["c3_w"], raw["c3_b"])
    return jnp.tanh(x)


# ---------------------------------------------------------------------------
# Main
# ---------------------------------------------------------------------------

if __name__ == "__main__":
    # opt.latent_dim=32, opt.channels=4, opt.img_size=16  (init_size = 4), batch = 2
    BATCH, LATENT_DIM, CHANNELS, IMG_SIZE = 2, 32, 4, 16

    key = jax.random.PRNGKey(0)
    k_params, k_z = jax.random.split(key)
    kernel_params, raw_params = init_params(k_params, LATENT_DIM, CHANNELS, IMG_SIZE)
    z = jax.random.normal(k_z, (BATCH, LATENT_DIM), jnp.float32)

    img = generator_forward(z, kernel_params, channels=CHANNELS, img_size=IMG_SIZE)
    img = jax.block_until_ready(img)

    assert img.shape == (BATCH, CHANNELS, IMG_SIZE, IMG_SIZE)
    ref = reference_forward(z, raw_params, CHANNELS, IMG_SIZE)
    max_err = float(jnp.max(jnp.abs(img - ref)))
    # bf16 matmul operands (f32 accumulation / elementwise) vs. f32 reference -> loosened tol.
    assert max_err < 5e-2, f"mismatch vs reference: {max_err}"
    assert bool(jnp.all(jnp.abs(img) <= 1.0))
    print("KERNEL_OK")
</pallas_src>

<mosaic_0001>
module attributes {stable_mosaic.version = 11 : i64} {
  func.func @_generator_kernel(%arg0: i32, %arg1: memref<8x32xf32, #tpu.memory_space<vmem>>, %arg2: memref<32x64xbf16, #tpu.memory_space<vmem>>, %arg3: memref<1x64xf32, #tpu.memory_space<vmem>>, %arg4: memref<64x256xbf16, #tpu.memory_space<vmem>>, %arg5: memref<1x256xf32, #tpu.memory_space<vmem>>, %arg6: memref<256x1024xbf16, #tpu.memory_space<vmem>>, %arg7: memref<1x1024xf32, #tpu.memory_space<vmem>>, %arg8: memref<8x1024xf32, #tpu.memory_space<vmem>>) attributes {dimension_semantics = [#tpu.dimension_semantics<parallel>], iteration_bounds = array<i64: 1>, scalar_prefetch = 0 : i64, scratch_operands = 0 : i64, tpu.core_type = #tpu.core_type<tc>, window_params = [{transform_indices = @transform_0, window_bounds = array<i64: 8, 32>}, {pipeline_mode = #tpu.pipeline_mode<synchronous>, transform_indices = @transform_1, window_bounds = array<i64: 32, 64>}, {pipeline_mode = #tpu.pipeline_mode<synchronous>, transform_indices = @transform_2, window_bounds = array<i64: 1, 64>}, {pipeline_mode = #tpu.pipeline_mode<synchronous>, transform_indices = @transform_3, window_bounds = array<i64: 64, 256>}, {pipeline_mode = #tpu.pipeline_mode<synchronous>, transform_indices = @transform_4, window_bounds = array<i64: 1, 256>}, {pipeline_mode = #tpu.pipeline_mode<synchronous>, transform_indices = @transform_5, window_bounds = array<i64: 256, 1024>}, {pipeline_mode = #tpu.pipeline_mode<synchronous>, transform_indices = @transform_6, window_bounds = array<i64: 1, 1024>}, {transform_indices = @transform_7, window_bounds = array<i64: 8, 1024>}]} {
    %c0 = arith.constant 0 : index
    %c0_0 = arith.constant 0 : index
    %0 = vector.load %arg1[%c0, %c0_0] : memref<8x32xf32, #tpu.memory_space<vmem>>, vector<8x32xf32>
    %1 = arith.truncf %0 : vector<8x32xf32> to vector<8x32xbf16>
    %c0_1 = arith.constant 0 : index
    %c0_2 = arith.constant 0 : index
    %2 = vector.load %arg2[%c0_1, %c0_2] : memref<32x64xbf16, #tpu.memory_space<vmem>>, vector<32x64xbf16>
    %cst = arith.constant dense<0.000000e+00> : vector<8x64xf32>
    %3 = tpu.matmul %1, %2, %cst {dimension_numbers = #tpu.dot_dimension_numbers<[1], [0], [0], [1], [0, 0, 1, 1], [], []>} : vector<8x32xbf16>, vector<32x64xbf16>, vector<8x64xf32> -> vector<8x64xf32>
    %c0_3 = arith.constant 0 : index
    %c0_4 = arith.constant 0 : index
    %4 = vector.load %arg3[%c0_3, %c0_4] : memref<1x64xf32, #tpu.memory_space<vmem>>, vector<1x64xf32>
    %5 = vector.broadcast %4 : vector<1x64xf32> to vector<8x64xf32>
    %6 = arith.addf %3, %5 : vector<8x64xf32>
    %cst_5 = arith.constant 0.000000e+00 : f32
    %7 = vector.broadcast %cst_5 : f32 to vector<8x64xf32>
    %8 = arith.maximumf %6, %7 : vector<8x64xf32>
    %9 = arith.truncf %8 : vector<8x64xf32> to vector<8x64xbf16>
    %c0_6 = arith.constant 0 : index
    %c0_7 = arith.constant 0 : index
    %10 = vector.load %arg4[%c0_6, %c0_7] : memref<64x256xbf16, #tpu.memory_space<vmem>>, vector<64x256xbf16>
    %cst_8 = arith.constant dense<0.000000e+00> : vector<8x256xf32>
    %11 = tpu.matmul %9, %10, %cst_8 {dimension_numbers = #tpu.dot_dimension_numbers<[1], [0], [0], [1], [0, 0, 1, 1], [], []>} : vector<8x64xbf16>, vector<64x256xbf16>, vector<8x256xf32> -> vector<8x256xf32>
    %c0_9 = arith.constant 0 : index
    %c0_10 = arith.constant 0 : index
    %12 = vector.load %arg5[%c0_9, %c0_10] : memref<1x256xf32, #tpu.memory_space<vmem>>, vector<1x256xf32>
    %13 = vector.broadcast %12 : vector<1x256xf32> to vector<8x256xf32>
    %14 = arith.addf %11, %13 : vector<8x256xf32>
    %cst_11 = arith.constant 0.000000e+00 : f32
    %15 = vector.broadcast %cst_11 : f32 to vector<8x256xf32>
    %16 = arith.maximumf %14, %15 : vector<8x256xf32>
    %17 = arith.truncf %16 : vector<8x256xf32> to vector<8x256xbf16>
    %c0_12 = arith.constant 0 : index
    %c0_13 = arith.constant 0 : index
    %18 = vector.load %arg6[%c0_12, %c0_13] : memref<256x1024xbf16, #tpu.memory_space<vmem>>, vector<256x1024xbf16>
    %cst_14 = arith.constant dense<0.000000e+00> : vector<8x1024xf32>
    %19 = tpu.matmul %17, %18, %cst_14 {dimension_numbers = #tpu.dot_dimension_numbers<[1], [0], [0], [1], [0, 0, 1, 1], [], []>} : vector<8x256xbf16>, vector<256x1024xbf16>, vector<8x1024xf32> -> vector<8x1024xf32>
    %c0_15 = arith.constant 0 : index
    %c0_16 = arith.constant 0 : index
    %20 = vector.load %arg7[%c0_15, %c0_16] : memref<1x1024xf32, #tpu.memory_space<vmem>>, vector<1x1024xf32>
    %21 = vector.broadcast %20 : vector<1x1024xf32> to vector<8x1024xf32>
    %22 = arith.addf %19, %21 : vector<8x1024xf32>
    %23 = math.tanh %22 : vector<8x1024xf32>
    %c0_17 = arith.constant 0 : index
    %c0_18 = arith.constant 0 : index
    %24 = vector.load %arg8[%c0_17, %c0_18] : memref<8x1024xf32, #tpu.memory_space<vmem>>, vector<8x1024xf32>
    tpu.vector_store %arg8[%c0_17, %c0_18], %23 {strides = array<i32>} : memref<8x1024xf32, #tpu.memory_space<vmem>>, vector<8x1024xf32>,
    return
  }
  func.func @transform_0(%arg0: i32) -> (i32, i32) {
    %c0_i32 = arith.constant 0 : i32
    %c0_i32_0 = arith.constant 0 : i32
    return %arg0, %c0_i32 : i32, i32
  }
  func.func @transform_1(%arg0: i32) -> (i32, i32) {
    %c0_i32 = arith.constant 0 : i32
    %c0_i32_0 = arith.constant 0 : i32
    %c0_i32_1 = arith.constant 0 : i32
    return %c0_i32, %c0_i32_0 : i32, i32
  }
  func.func @transform_2(%arg0: i32) -> (i32, i32) {
    %c0_i32 = arith.constant 0 : i32
    %c0_i32_0 = arith.constant 0 : i32
    %c0_i32_1 = arith.constant 0 : i32
    return %c0_i32, %c0_i32_0 : i32, i32
  }
  func.func @transform_3(%arg0: i32) -> (i32, i32) {
    %c0_i32 = arith.constant 0 : i32
    %c0_i32_0 = arith.constant 0 : i32
    %c0_i32_1 = arith.constant 0 : i32
    return %c0_i32, %c0_i32_0 : i32, i32
  }
  func.func @transform_4(%arg0: i32) -> (i32, i32) {
    %c0_i32 = arith.constant 0 : i32
    %c0_i32_0 = arith.constant 0 : i32
    %c0_i32_1 = arith.constant 0 : i32
    return %c0_i32, %c0_i32_0 : i32, i32
  }
  func.func @transform_5(%arg0: i32) -> (i32, i32) {
    %c0_i32 = arith.constant 0 : i32
    %c0_i32_0 = arith.constant 0 : i32
    %c0_i32_1 = arith.constant 0 : i32
    return %c0_i32, %c0_i32_0 : i32, i32
  }
  func.func @transform_6(%arg0: i32) -> (i32, i32) {
    %c0_i32 = arith.constant 0 : i32
    %c0_i32_0 = arith.constant 0 : i32
    %c0_i32_1 = arith.constant 0 : i32
    return %c0_i32, %c0_i32_0 : i32, i32
  }
  func.func @transform_7(%arg0: i32) -> (i32, i32) {
    %c0_i32 = arith.constant 0 : i32
    %c0_i32_0 = arith.constant 0 : i32
    return %arg0, %c0_i32 : i32, i32
  }
}

</mosaic_0001>

<llo_original>
// kernel: generator_forward.1
$region0: #{generator_forward.1}
  #allocation0 [shape = 'u32[]', space=smem, size = 0x4, offset = 0x4, fixed_abs, tag = 'smem constant byte address 0x4 - core index']
  #allocation1 [shape = 'u32[144,128]{1,0:T(1,128)}', space=vmem, size = 0x12000, scoped, tag = 'internal scratch']
  %s0 = inlined_call_operand.vmem [shape: f32[8,32], index: 0, kind: input, shape index: {}]
  %s1 = inlined_call_operand.vmem [shape: bf16[32,64], index: 1, kind: input, shape index: {}]
  %s2 = inlined_call_operand.vmem [shape: f32[1,64], index: 2, kind: input, shape index: {}]
  %s3 = inlined_call_operand.hbm [shape: bf16[64,256], index: 3, kind: input, shape index: {}]
  %s4 = inlined_call_operand.vmem [shape: f32[1,256], index: 4, kind: input, shape index: {}]
  %s5 = inlined_call_operand.hbm [shape: bf16[256,1024], index: 5, kind: input, shape index: {}]
  %s6 = inlined_call_operand.vmem [shape: f32[1,1024], index: 6, kind: input, shape index: {}]
  %s7 = inlined_call_operand.vmem [shape: f32[8,1024], index: 7, kind: output, shape index: {}]
  %s8 = sld [smem:[#allocation0]]
  $region46: #{generator_forward.1} parent=0
    _
  %s10 = ssub.s32 1, %s8
  %s11 = scalar_select 0, %s10, %s8
  $region1: #{generator_forward.1} parent=0
    #allocation2 [shape = 'u8[32768]{0}', space=vmem, size = 0x8000, scoped, tag = 'input window, operand 3, single buffered']
    #allocation3 [shape = 's32[1]{0}', space=sflag, size = 0x4, scoped, tag = 'scoped memory for generator_forward.1']
    #allocation4 [shape = 'u8[524288]{0}', space=vmem, size = 0x80000, scoped, tag = 'input window, operand 5, single buffered']
    #allocation5 [shape = 's32[1]{0}', space=sflag, size = 0x4, scoped, tag = 'scoped memory for generator_forward.1']
    %12 = vsyncpa [#allocation3], 0
    %13 = vsyncpa [#allocation5], 0
    // Predicated region
    $region2: #{generator_forward.1} parent=1 // pred_check
      _
    $region3: #{generator_forward.1} parent=1 // pred_check_branch
      %15 = sbr.rel (0) target = $region5
    $region4: #{generator_forward.1} parent=1 // pred_region
      _
    $region5: #{generator_forward.1} parent=1 // pred_fallthru
      _
    // Predicated region
    $region6: #{generator_forward.1} parent=1 // pred_check
      _
    $region7: #{generator_forward.1} parent=1 // pred_check_branch
      %17 = sbr.rel (0) target = $region9
    $region8: #{generator_forward.1} parent=1 // pred_region
      _
    $region9: #{generator_forward.1} parent=1 // pred_fallthru
      _
    // Predicated region
    $region10: #{generator_forward.1} parent=1 // pred_check
      _
    $region11: #{generator_forward.1} parent=1 // pred_check_branch
      %19 = sbr.rel (0) target = $region13
    $region12: #{generator_forward.1} parent=1 // pred_region
      _
    $region13: #{generator_forward.1} parent=1 // pred_fallthru
      _
    // Predicated region
    $region14: #{generator_forward.1} parent=1 // pred_check
      _
    $region15: #{generator_forward.1} parent=1 // pred_check_branch
      %21 = sbr.rel (0) target = $region17
    $region16: #{generator_forward.1} parent=1 // pred_region
      %s23 = ssub.s32 1024, 1024
      %24 = vsyncadd [#allocation3], %s23
      %s25 = sshll.u32 [#allocation2], 4
      %s26 = int_to_ptr.vmem [resolvable:$true] %s25
      %31 = dma.hbm_to_vmem [thread:$0]  %s3, 1024, %s26, [#allocation3], 128, 128, 8
    $region17: #{generator_forward.1} parent=1 // pred_fallthru
      _
    // Predicated region
    $region18: #{generator_forward.1} parent=1 // pred_check
      _
    $region19: #{generator_forward.1} parent=1 // pred_check_branch
      %33 = sbr.rel (0) target = $region21
    $region20: #{generator_forward.1} parent=1 // pred_region
      _
    $region21: #{generator_forward.1} parent=1 // pred_fallthru
      _
    // Predicated region
    $region22: #{generator_forward.1} parent=1 // pred_check
      _
    $region23: #{generator_forward.1} parent=1 // pred_check_branch
      %35 = sbr.rel (0) target = $region25
    $region24: #{generator_forward.1} parent=1 // pred_region
      %s37 = ssub.s32 16384, 16384
      %38 = vsyncadd [#allocation5], %s37
      %s39 = sshll.u32 [#allocation4], 4
      %s40 = int_to_ptr.vmem [resolvable:$true] %s39
      %45 = dma.hbm_to_vmem [thread:$0]  %s5, 16384, %s40, [#allocation5], 512, 512, 32
    $region25: #{generator_forward.1} parent=1 // pred_fallthru
      _
    // Predicated region
    $region26: #{generator_forward.1} parent=1 // pred_check
      _
    $region27: #{generator_forward.1} parent=1 // pred_check_branch
      %47 = sbr.rel (0) target = $region29
    $region28: #{generator_forward.1} parent=1 // pred_region
      _
    $region29: #{generator_forward.1} parent=1 // pred_fallthru
      _
    // Predicated region
    $region30: #{generator_forward.1} parent=1 // pred_check
      _
    $region31: #{generator_forward.1} parent=1 // pred_check_branch
      %49 = sbr.rel (0) target = $region33
    $region32: #{generator_forward.1} parent=1 // pred_region
      %50 = dma.done [#allocation3], 1024
    $region33: #{generator_forward.1} parent=1 // pred_fallthru
      _
    // Predicated region
    $region34: #{generator_forward.1} parent=1 // pred_check
      _
    $region35: #{generator_forward.1} parent=1 // pred_check_branch
      %52 = sbr.rel (0) target = $region37
    $region36: #{generator_forward.1} parent=1 // pred_region
      %53 = dma.done [#allocation5], 16384
    $region37: #{generator_forward.1} parent=1 // pred_fallthru
      _
    %v55 = vld [vmem:[%s0] sm:$0xff]
    %v56 = vpack.c.bf16 %v55, %v55
    %v57 = vld [vmem:[%s1] sm:$0xf]
    %v58 = vld [vmem:[%s1 + $0x4] sm:$0xf]
    %v59 = vld [vmem:[%s1 + $0x8] sm:$0xf]
    %v60 = vld [vmem:[%s1 + $0xc] sm:$0xf]
    %v61 = vld [vmem:[%s2] sm:$0x1]
    %v63 = vlaneseq
    %v64 = vshrl.u32 %v63, 7
    %v65 = vsub.s32 0, %v64
    %v66 = vrot.slane %v61, %v65
    %v72 = vunpack.c.l.b16 %v57
    %v73 = vunpack.c.l.b16 %v58
    %v74 = vunpack.c.l.b16 %v59
    %v75 = vunpack.c.l.b16 %v60
    %v76 = vpack.c.b16 %v73, %v72
    %v77 = vpack.c.b16 %v75, %v74
    %vm80 = vcmask 261120
    %v82 = vsel %vm80, %v56, 0
    %84 = vmatprep.subr.bf16.mxu0 0
    %85 = vmatpush1.bf16.msra.mxu0 %v76
    %86 = vmatprep.subr.bf16.mxu0 0
    %87 = vmatpush1.bf16.msra.mxu0 %v77
    %88 = vmatprep.subr.bf16.mxu0 0
    %89 = vmatpush1.bf16.msra.mxu0 0
    %90 = vmatprep.subr.bf16.mxu0 0
    %91 = vmatpush1.bf16.msra.mxu0 0
    %92 = vmatprep.subr.bf16.mxu0 0
    %93 = vmatpush1.bf16.msra.mxu0 0
    %94 = vmatprep.subr.bf16.mxu0 0
    %95 = vmatpush1.bf16.msra.mxu0 0
    %96 = vmatprep.subr.bf16.mxu0 0
    %97 = vmatpush1.bf16.msra.mxu0 0
    %98 = vmatprep.subr.bf16.mxu0 0
    %99 = vmatpush1.bf16.msra.mxu0 0
    %100 = vmatprep.subr.bf16.mxu0 0
    %101 = vmatpush1.bf16.msra.mxu0 0
    %102 = vmatprep.subr.bf16.mxu0 0
    %103 = vmatpush1.bf16.msra.mxu0 0
    %104 = vmatprep.subr.bf16.mxu0 0
    %105 = vmatpush1.bf16.msra.mxu0 0
    %106 = vmatprep.subr.bf16.mxu0 0
    %107 = vmatpush1.bf16.msra.mxu0 0
    %108 = vmatprep.subr.bf16.mxu0 0
    %109 = vmatpush1.bf16.msra.mxu0 0
    %110 = vmatprep.subr.bf16.mxu0 0
    %111 = vmatpush1.bf16.msra.mxu0 0
    %112 = vmatprep.subr.bf16.mxu0 0
    %113 = vmatpush1.bf16.msra.mxu0 0
    %114 = vmatprep.subr.bf16.mxu0 0
    %115 = vmatpush1.bf16.msra.mxu0 0
    %116 = vmatprep.mubr.bf16.mxu0 0
    %117 = vmatmul.mubr.bf16.gmra.mrb[0].mxu0 %v82
    %v118 = vpop.f32.mrb[0].mxu0
    %v119 = vadd.f32 %v66, %v118
    %v120 = vpop.f32.mrb[0].mxu0
    %v121 = vpop.f32.mrb[0].mxu0
    %v122 = vpop.f32.mrb[0].mxu0
    %123 = vdwg.mxu0
    %v124 = vmax.f32 %v119, 0.0
    %v125 = vpack.c.bf16 %v124, %v124
    %v126 = vld [vmem:[#allocation2] sm:$0xff]
    %v127 = vld [vmem:[#allocation2 + $0x8] sm:$0xff]
    %v128 = vld [vmem:[#allocation2 + $0x10] sm:$0xff]
    %v129 = vld [vmem:[#allocation2 + $0x18] sm:$0xff]
    %v130 = vld [vmem:[#allocation2 + $0x20] sm:$0xff]
    %v131 = vld [vmem:[#allocation2 + $0x28] sm:$0xff]
    %v132 = vld [vmem:[#allocation2 + $0x30] sm:$0xff]
    %v133 = vld [vmem:[#allocation2 + $0x38] sm:$0xff]
    %v134 = vld [vmem:[%s4] sm:$0x3]
    %v136 = vlaneseq
    %v137 = vshrl.u32 %v136, 7
    %v138 = vsub.s32 0, %v137
    %v139 = vrot.slane %v134, %v138
    %v140 = vlaneseq
    %v141 = vshrl.u32 %v140, 7
    %v142 = vsub.s32 1, %v141
    %v143 = vrot.slane %v134, %v142
    %v154 = vunpack.c.l.b16 %v126
    %v155 = vunpack.c.h.b16 %v126
    %v156 = vunpack.c.l.b16 %v127
    %v157 = vunpack.c.h.b16 %v127
    %v158 = vunpack.c.l.b16 %v128
    %v159 = vunpack.c.h.b16 %v128
    %v160 = vunpack.c.l.b16 %v129
    %v161 = vunpack.c.h.b16 %v129
    %v162 = vunpack.c.l.b16 %v130
    %v163 = vunpack.c.h.b16 %v130
    %v164 = vunpack.c.l.b16 %v131
    %v165 = vunpack.c.h.b16 %v131
    %v166 = vunpack.c.l.b16 %v132
    %v167 = vunpack.c.h.b16 %v132
    %v168 = vunpack.c.l.b16 %v133
    %v169 = vunpack.c.h.b16 %v133
    %v170 = vpack.c.b16 %v156, %v154
    %v171 = vpack.c.b16 %v157, %v155
    %v172 = vpack.c.b16 %v160, %v158
    %v173 = vpack.c.b16 %v161, %v159
    %v174 = vpack.c.b16 %v164, %v162
    %v175 = vpack.c.b16 %v165, %v163
    %v176 = vpack.c.b16 %v168, %v166
    %v177 = vpack.c.b16 %v169, %v167
    %vm186 = vcmask 523264
    %v188 = vsel %vm186, %v125, 0
    %190 = vmatprep.subr.bf16.mxu0 %v171
    %191 = vmatpush1.bf16.msra.mxu0 %v170
    %192 = vmatprep.subr.bf16.mxu0 %v173
    %193 = vmatpush1.bf16.msra.mxu0 %v172
    %194 = vmatprep.subr.bf16.mxu0 %v175
    %195 = vmatpush1.bf16.msra.mxu0 %v174
    %196 = vmatprep.subr.bf16.mxu0 %v177
    %197 = vmatpush1.bf16.msra.mxu0 %v176
    %198 = vmatprep.subr.bf16.mxu0 0
    %199 = vmatpush1.bf16.msra.mxu0 0
    %200 = vmatprep.subr.bf16.mxu0 0
    %201 = vmatpush1.bf16.msra.mxu0 0
    %202 = vmatprep.subr.bf16.mxu0 0
    %203 = vmatpush1.bf16.msra.mxu0 0
    %204 = vmatprep.subr.bf16.mxu0 0
    %205 = vmatpush1.bf16.msra.mxu0 0
    %206 = vmatprep.subr.bf16.mxu0 0
    %207 = vmatpush1.bf16.msra.mxu0 0
    %208 = vmatprep.subr.bf16.mxu0 0
    %209 = vmatpush1.bf16.msra.mxu0 0
    %210 = vmatprep.subr.bf16.mxu0 0
    %211 = vmatpush1.bf16.msra.mxu0 0
    %212 = vmatprep.subr.bf16.mxu0 0
    %213 = vmatpush1.bf16.msra.mxu0 0
    %214 = vmatprep.subr.bf16.mxu0 0
    %215 = vmatpush1.bf16.msra.mxu0 0
    %216 = vmatprep.subr.bf16.mxu0 0
    %217 = vmatpush1.bf16.msra.mxu0 0
    %218 = vmatprep.subr.bf16.mxu0 0
    %219 = vmatpush1.bf16.msra.mxu0 0
    %220 = vmatprep.subr.bf16.mxu0 0
    %221 = vmatpush1.bf16.msra.mxu0 0
    %222 = vmatprep.mubr.bf16.mxu0 0
    %223 = vmatmul.mubr.bf16.gmra.mrb[0].mxu0 %v188
    %v224 = vpop.f32.mrb[0].mxu0
    %v225 = vadd.f32 %v139, %v224
    %v226 = vpop.f32.mrb[0].mxu0
    %v227 = vadd.f32 %v143, %v226
    %v228 = vpop.f32.mrb[0].mxu0
    %v229 = vpop.f32.mrb[0].mxu0
    %230 = vdwg.mxu0
    %v231 = vmax.f32 %v225, 0.0
    %v232 = vmax.f32 %v227, 0.0
    %v233 = vpack.c.bf16 %v231, %v231
    %v234 = vpack.c.bf16 %v232, %v232
    %v235 = vld [vmem:[#allocation4] sm:$0xff]
    %v236 = vld [vmem:[#allocation4 + $0x8] sm:$0xff]
    %v237 = vld [vmem:[#allocation4 + $0x10] sm:$0xff]
    %v238 = vld [vmem:[#allocation4 + $0x18] sm:$0xff]
    %v239 = vld [vmem:[#allocation4 + $0x20] sm:$0xff]
    %v240 = vld [vmem:[#allocation4 + $0x28] sm:$0xff]
    %v241 = vld [vmem:[#allocation4 + $0x30] sm:$0xff]
    %v242 = vld [vmem:[#allocation4 + $0x38] sm:$0xff]
    %v243 = vld [vmem:[#allocation4 + $0x40] sm:$0xff]
    %v244 = vld [vmem:[#allocation4 + $0x48] sm:$0xff]
    %v245 = vld [vmem:[#allocation4 + $0x50] sm:$0xff]
    %v246 = vld [vmem:[#allocation4 + $0x58] sm:$0xff]
    %v247 = vld [vmem:[#allocation4 + $0x60] sm:$0xff]
    %v248 = vld [vmem:[#allocation4 + $0x68] sm:$0xff]
    %v249 = vld [vmem:[#allocation4 + $0x70] sm:$0xff]
    %v250 = vld [vmem:[#allocation4 + $0x78] sm:$0xff]
    %v251 = vld [vmem:[#allocation4 + $0x80] sm:$0xff]
    %v252 = vld [vmem:[#allocation4 + $0x88] sm:$0xff]
    %v253 = vld [vmem:[#allocation4 + $0x90] sm:$0xff]
    %v254 = vld [vmem:[#allocation4 + $0x98] sm:$0xff]
    %v255 = vld [vmem:[#allocation4 + $0xa0] sm:$0xff]
    %v256 = vld [vmem:[#allocation4 + $0xa8] sm:$0xff]
    %v257 = vld [vmem:[#allocation4 + $0xb0] sm:$0xff]
    %v258 = vld [vmem:[#allocation4 + $0xb8] sm:$0xff]
    %v259 = vld [vmem:[#allocation4 + $0xc0] sm:$0xff]
    %v260 = vld [vmem:[#allocation4 + $0xc8] sm:$0xff]
    %v261 = vld [vmem:[#allocation4 + $0xd0] sm:$0xff]
    %v262 = vld [vmem:[#allocation4 + $0xd8] sm:$0xff]
    %v263 = vld [vmem:[#allocation4 + $0xe0] sm:$0xff]
    %v264 = vld [vmem:[#allocation4 + $0xe8] sm:$0xff]
    %v265 = vld [vmem:[#allocation4 + $0xf0] sm:$0xff]
    %v266 = vld [vmem:[#allocation4 + $0xf8] sm:$0xff]
    %v267 = vld [vmem:[#allocation4 + $0x100] sm:$0xff]
    %v268 = vld [vmem:[#allocation4 + $0x108] sm:$0xff]
    %v269 = vld [vmem:[#allocation4 + $0x110] sm:$0xff]
    %v270 = vld [vmem:[#allocation4 + $0x118] sm:$0xff]
    %v271 = vld [vmem:[#allocation4 + $0x120] sm:$0xff]
    %v272 = vld [vmem:[#allocation4 + $0x128] sm:$0xff]
    %v273 = vld [vmem:[#allocation4 + $0x130] sm:$0xff]
    %v274 = vld [vmem:[#allocation4 + $0x138] sm:$0xff]
    %v275 = vld [vmem:[#allocation4 + $0x140] sm:$0xff]
    %v276 = vld [vmem:[#allocation4 + $0x148] sm:$0xff]
    %v277 = vld [vmem:[#allocation4 + $0x150] sm:$0xff]
    %v278 = vld [vmem:[#allocation4 + $0x158] sm:$0xff]
    %v279 = vld [vmem:[#allocation4 + $0x160] sm:$0xff]
    %v280 = vld [vmem:[#allocation4 + $0x168] sm:$0xff]
    %v281 = vld [vmem:[#allocation4 + $0x170] sm:$0xff]
    %v282 = vld [vmem:[#allocation4 + $0x178] sm:$0xff]
    %v283 = vld [vmem:[#allocation4 + $0x180] sm:$0xff]
    %v284 = vld [vmem:[#allocation4 + $0x188] sm:$0xff]
    %v285 = vld [vmem:[#allocation4 + $0x190] sm:$0xff]
    %v286 = vld [vmem:[#allocation4 + $0x198] sm:$0xff]
    %v287 = vld [vmem:[#allocation4 + $0x1a0] sm:$0xff]
    %v288 = vld [vmem:[#allocation4 + $0x1a8] sm:$0xff]
    %v289 = vld [vmem:[#allocation4 + $0x1b0] sm:$0xff]
    %v290 = vld [vmem:[#allocation4 + $0x1b8] sm:$0xff]
    %v291 = vld [vmem:[#allocation4 + $0x1c0] sm:$0xff]
    %v292 = vld [vmem:[#allocation4 + $0x1c8] sm:$0xff]
    %v293 = vld [vmem:[#allocation4 + $0x1d0] sm:$0xff]
    %v294 = vld [vmem:[#allocation4 + $0x1d8] sm:$0xff]
    %v295 = vld [vmem:[#allocation4 + $0x1e0] sm:$0xff]
    %v296 = vld [vmem:[#allocation4 + $0x1e8] sm:$0xff]
    %v297 = vld [vmem:[#allocation4 + $0x1f0] sm:$0xff]
    %v298 = vld [vmem:[#allocation4 + $0x1f8] sm:$0xff]
    %v299 = vld [vmem:[#allocation4 + $0x200] sm:$0xff]
    %v300 = vld [vmem:[#allocation4 + $0x208] sm:$0xff]
    %v301 = vld [vmem:[#allocation4 + $0x210] sm:$0xff]
    %v302 = vld [vmem:[#allocation4 + $0x218] sm:$0xff]
    %v303 = vld [vmem:[#allocation4 + $0x220] sm:$0xff]
    %v304 = vld [vmem:[#allocation4 + $0x228] sm:$0xff]
    %v305 = vld [vmem:[#allocation4 + $0x230] sm:$0xff]
    %v306 = vld [vmem:[#allocation4 + $0x238] sm:$0xff]
    %v307 = vld [vmem:[#allocation4 + $0x240] sm:$0xff]
    %v308 = vld [vmem:[#allocation4 + $0x248] sm:$0xff]
    %v309 = vld [vmem:[#allocation4 + $0x250] sm:$0xff]
    %v310 = vld [vmem:[#allocation4 + $0x258] sm:$0xff]
    %v311 = vld [vmem:[#allocation4 + $0x260] sm:$0xff]
    %v312 = vld [vmem:[#allocation4 + $0x268] sm:$0xff]
    %v313 = vld [vmem:[#allocation4 + $0x270] sm:$0xff]
    %v314 = vld [vmem:[#allocation4 + $0x278] sm:$0xff]
    %v315 = vld [vmem:[#allocation4 + $0x280] sm:$0xff]
    %v316 = vld [vmem:[#allocation4 + $0x288] sm:$0xff]
    %v317 = vld [vmem:[#allocation4 + $0x290] sm:$0xff]
    %v318 = vld [vmem:[#allocation4 + $0x298] sm:$0xff]
    %v319 = vld [vmem:[#allocation4 + $0x2a0] sm:$0xff]
    %v320 = vld [vmem:[#allocation4 + $0x2a8] sm:$0xff]
    %v321 = vld [vmem:[#allocation4 + $0x2b0] sm:$0xff]
    %v322 = vld [vmem:[#allocation4 + $0x2b8] sm:$0xff]
    %v323 = vld [vmem:[#allocation4 + $0x2c0] sm:$0xff]
    %v324 = vld [vmem:[#allocation4 + $0x2c8] sm:$0xff]
    %v325 = vld [vmem:[#allocation4 + $0x2d0] sm:$0xff]
    %v326 = vld [vmem:[#allocation4 + $0x2d8] sm:$0xff]
    %v327 = vld [vmem:[#allocation4 + $0x2e0] sm:$0xff]
    %v328 = vld [vmem:[#allocation4 + $0x2e8] sm:$0xff]
    %v329 = vld [vmem:[#allocation4 + $0x2f0] sm:$0xff]
    %v330 = vld [vmem:[#allocation4 + $0x2f8] sm:$0xff]
    %v331 = vld [vmem:[#allocation4 + $0x300] sm:$0xff]
    %v332 = vld [vmem:[#allocation4 + $0x308] sm:$0xff]
    %v333 = vld [vmem:[#allocation4 + $0x310] sm:$0xff]
    %v334 = vld [vmem:[#allocation4 + $0x318] sm:$0xff]
    %v335 = vld [vmem:[#allocation4 + $0x320] sm:$0xff]
    %v336 = vld [vmem:[#allocation4 + $0x328] sm:$0xff]
    %v337 = vld [vmem:[#allocation4 + $0x330] sm:$0xff]
    %v338 = vld [vmem:[#allocation4 + $0x338] sm:$0xff]
    %v339 = vld [vmem:[#allocation4 + $0x340] sm:$0xff]
    %v340 = vld [vmem:[#allocation4 + $0x348] sm:$0xff]
    %v341 = vld [vmem:[#allocation4 + $0x350] sm:$0xff]
    %v342 = vld [vmem:[#allocation4 + $0x358] sm:$0xff]
    %v343 = vld [vmem:[#allocation4 + $0x360] sm:$0xff]
    %v344 = vld [vmem:[#allocation4 + $0x368] sm:$0xff]
    %v345 = vld [vmem:[#allocation4 + $0x370] sm:$0xff]
    %v346 = vld [vmem:[#allocation4 + $0x378] sm:$0xff]
    %v347 = vld [vmem:[#allocation4 + $0x380] sm:$0xff]
    %v348 = vld [vmem:[#allocation4 + $0x388] sm:$0xff]
    %v349 = vld [vmem:[#allocation4 + $0x390] sm:$0xff]
    %v350 = vld [vmem:[#allocation4 + $0x398] sm:$0xff]
    %v351 = vld [vmem:[#allocation4 + $0x3a0] sm:$0xff]
    %v352 = vld [vmem:[#allocation4 + $0x3a8] sm:$0xff]
    %v353 = vld [vmem:[#allocation4 + $0x3b0] sm:$0xff]
    %v354 = vld [vmem:[#allocation4 + $0x3b8] sm:$0xff]
    %v355 = vld [vmem:[#allocation4 + $0x3c0] sm:$0xff]
    %v356 = vld [vmem:[#allocation4 + $0x3c8] sm:$0xff]
    %v357 = vld [vmem:[#allocation4 + $0x3d0] sm:$0xff]
    %v358 = vld [vmem:[#allocation4 + $0x3d8] sm:$0xff]
    %v359 = vld [vmem:[#allocation4 + $0x3e0] sm:$0xff]
    %v360 = vld [vmem:[#allocation4 + $0x3e8] sm:$0xff]
    %v361 = vld [vmem:[#allocation4 + $0x3f0] sm:$0xff]
    %v362 = vld [vmem:[#allocation4 + $0x3f8] sm:$0xff]
    %v363 = vld [vmem:[%s6] sm:$0xff]
    %v365 = vlaneseq
    %v366 = vshrl.u32 %v365, 7
    %v367 = vsub.s32 0, %v366
    %v368 = vrot.slane %v363, %v367
    %v369 = vlaneseq
    %v370 = vshrl.u32 %v369, 7
    %v371 = vsub.s32 1, %v370
    %v372 = vrot.slane %v363, %v371
    %v373 = vlaneseq
    %v374 = vshrl.u32 %v373, 7
    %v375 = vsub.s32 2, %v374
    %v376 = vrot.slane %v363, %v375
    %v377 = vlaneseq
    %v378 = vshrl.u32 %v377, 7
    %v379 = vsub.s32 3, %v378
    %v380 = vrot.slane %v363, %v379
    %v381 = vlaneseq
    %v382 = vshrl.u32 %v381, 7
    %v383 = vsub.s32 4, %v382
    %v384 = vrot.slane %v363, %v383
    %v385 = vlaneseq
    %v386 = vshrl.u32 %v385, 7
    %v387 = vsub.s32 5, %v386
    %v388 = vrot.slane %v363, %v387
    %v389 = vlaneseq
    %v390 = vshrl.u32 %v389, 7
    %v391 = vsub.s32 6, %v390
    %v392 = vrot.slane %v363, %v391
    %v393 = vlaneseq
    %v394 = vshrl.u32 %v393, 7
    %v395 = vsub.s32 7, %v394
    %v396 = vrot.slane %v363, %v395
    %v533 = vunpack.c.l.b16 %v235
    %v534 = vunpack.c.h.b16 %v235
    %v535 = vunpack.c.l.b16 %v236
    %v536 = vunpack.c.h.b16 %v236
    %v537 = vunpack.c.l.b16 %v237
    %v538 = vunpack.c.h.b16 %v237
    %v539 = vunpack.c.l.b16 %v238
    %v540 = vunpack.c.h.b16 %v238
    %v541 = vunpack.c.l.b16 %v239
    %v542 = vunpack.c.h.b16 %v239
    %v543 = vunpack.c.l.b16 %v240
    %v544 = vunpack.c.h.b16 %v240
    %v545 = vunpack.c.l.b16 %v241
    %v546 = vunpack.c.h.b16 %v241
    %v547 = vunpack.c.l.b16 %v242
    %v548 = vunpack.c.h.b16 %v242
    %v549 = vunpack.c.l.b16 %v243
    %v550 = vunpack.c.h.b16 %v243
    %v551 = vunpack.c.l.b16 %v244
    %v552 = vunpack.c.h.b16 %v244
    %v553 = vunpack.c.l.b16 %v245
    %v554 = vunpack.c.h.b16 %v245
    %v555 = vunpack.c.l.b16 %v246
    %v556 = vunpack.c.h.b16 %v246
    %v557 = vunpack.c.l.b16 %v247
    %v558 = vunpack.c.h.b16 %v247
    %v559 = vunpack.c.l.b16 %v248
    %v560 = vunpack.c.h.b16 %v248
    %v561 = vunpack.c.l.b16 %v249
    %v562 = vunpack.c.h.b16 %v249
    %v563 = vunpack.c.l.b16 %v250
    %v564 = vunpack.c.h.b16 %v250
    %v565 = vunpack.c.l.b16 %v251
    %v566 = vunpack.c.h.b16 %v251
    %v567 = vunpack.c.l.b16 %v252
    %v568 = vunpack.c.h.b16 %v252
    %v569 = vunpack.c.l.b16 %v253
    %v570 = vunpack.c.h.b16 %v253
    %v571 = vunpack.c.l.b16 %v254
    %v572 = vunpack.c.h.b16 %v254
    %v573 = vunpack.c.l.b16 %v255
    %v574 = vunpack.c.h.b16 %v255
    %v575 = vunpack.c.l.b16 %v256
    %v576 = vunpack.c.h.b16 %v256
    %v577 = vunpack.c.l.b16 %v257
    %v578 = vunpack.c.h.b16 %v257
    %v579 = vunpack.c.l.b16 %v258
    %v580 = vunpack.c.h.b16 %v258
    %v581 = vunpack.c.l.b16 %v259
    %v582 = vunpack.c.h.b16 %v259
    %v583 = vunpack.c.l.b16 %v260
    %v584 = vunpack.c.h.b16 %v260
    %v585 = vunpack.c.l.b16 %v261
    %v586 = vunpack.c.h.b16 %v261
    %v587 = vunpack.c.l.b16 %v262
    %v588 = vunpack.c.h.b16 %v262
    %v589 = vunpack.c.l.b16 %v263
    %v590 = vunpack.c.h.b16 %v263
    %v591 = vunpack.c.l.b16 %v264
    %v592 = vunpack.c.h.b16 %v264
    %v593 = vunpack.c.l.b16 %v265
    %v594 = vunpack.c.h.b16 %v265
    %v595 = vunpack.c.l.b16 %v266
    %v596 = vunpack.c.h.b16 %v266
    %v597 = vunpack.c.l.b16 %v267
    %v598 = vunpack.c.h.b16 %v267
    %v599 = vunpack.c.l.b16 %v268
    %v600 = vunpack.c.h.b16 %v268
    %v601 = vunpack.c.l.b16 %v269
    %v602 = vunpack.c.h.b16 %v269
    %v603 = vunpack.c.l.b16 %v270
    %v604 = vunpack.c.h.b16 %v270
    %v605 = vunpack.c.l.b16 %v271
    %v606 = vunpack.c.h.b16 %v271
    %v607 = vunpack.c.l.b16 %v272
    %v608 = vunpack.c.h.b16 %v272
    %v609 = vunpack.c.l.b16 %v273
    %v610 = vunpack.c.h.b16 %v273
    %v611 = vunpack.c.l.b16 %v274
    %v612 = vunpack.c.h.b16 %v274
    %v613 = vunpack.c.l.b16 %v275
    %v614 = vunpack.c.h.b16 %v275
    %v615 = vunpack.c.l.b16 %v276
    %v616 = vunpack.c.h.b16 %v276
    %v617 = vunpack.c.l.b16 %v277
    %v618 = vunpack.c.h.b16 %v277
    %v619 = vunpack.c.l.b16 %v278
    %v620 = vunpack.c.h.b16 %v278
    %v621 = vunpack.c.l.b16 %v279
    %v622 = vunpack.c.h.b16 %v279
    %v623 = vunpack.c.l.b16 %v280
    %v624 = vunpack.c.h.b16 %v280
    %v625 = vunpack.c.l.b16 %v281
    %v626 = vunpack.c.h.b16 %v281
    %v627 = vunpack.c.l.b16 %v282
    %v628 = vunpack.c.h.b16 %v282
    %v629 = vunpack.c.l.b16 %v283
    %v630 = vunpack.c.h.b16 %v283
    %v631 = vunpack.c.l.b16 %v284
    %v632 = vunpack.c.h.b16 %v284
    %v633 = vunpack.c.l.b16 %v285
    %v634 = vunpack.c.h.b16 %v285
    %v635 = vunpack.c.l.b16 %v286
    %v636 = vunpack.c.h.b16 %v286
    %v637 = vunpack.c.l.b16 %v287
    %v638 = vunpack.c.h.b16 %v287
    %v639 = vunpack.c.l.b16 %v288
    %v640 = vunpack.c.h.b16 %v288
    %v641 = vunpack.c.l.b16 %v289
    %v642 = vunpack.c.h.b16 %v289
    %v643 = vunpack.c.l.b16 %v290
    %v644 = vunpack.c.h.b16 %v290
    %v645 = vunpack.c.l.b16 %v291
    %v646 = vunpack.c.h.b16 %v291
    %v647 = vunpack.c.l.b16 %v292
    %v648 = vunpack.c.h.b16 %v292
    %v649 = vunpack.c.l.b16 %v293
    %v650 = vunpack.c.h.b16 %v293
    %v651 = vunpack.c.l.b16 %v294
    %v652 = vunpack.c.h.b16 %v294
    %v653 = vunpack.c.l.b16 %v295
    %v654 = vunpack.c.h.b16 %v295
    %v655 = vunpack.c.l.b16 %v296
    %v656 = vunpack.c.h.b16 %v296
    %v657 = vunpack.c.l.b16 %v297
    %v658 = vunpack.c.h.b16 %v297
    %v659 = vunpack.c.l.b16 %v298
    %v660 = vunpack.c.h.b16 %v298
    %v661 = vunpack.c.l.b16 %v299
    %v662 = vunpack.c.h.b16 %v299
    %v663 = vunpack.c.l.b16 %v300
    %v664 = vunpack.c.h.b16 %v300
    %v665 = vunpack.c.l.b16 %v301
    %v666 = vunpack.c.h.b16 %v301
    %v667 = vunpack.c.l.b16 %v302
    %v668 = vunpack.c.h.b16 %v302
    %v669 = vunpack.c.l.b16 %v303
    %v670 = vunpack.c.h.b16 %v303
    %v671 = vunpack.c.l.b16 %v304
    %v672 = vunpack.c.h.b16 %v304
    %v673 = vunpack.c.l.b16 %v305
    %v674 = vunpack.c.h.b16 %v305
    %v675 = vunpack.c.l.b16 %v306
    %v676 = vunpack.c.h.b16 %v306
    %v677 = vunpack.c.l.b16 %v307
    %v678 = vunpack.c.h.b16 %v307
    %v679 = vunpack.c.l.b16 %v308
    %v680 = vunpack.c.h.b16 %v308
    %v681 = vunpack.c.l.b16 %v309
    %v682 = vunpack.c.h.b16 %v309
    %v683 = vunpack.c.l.b16 %v310
    %v684 = vunpack.c.h.b16 %v310
    %v685 = vunpack.c.l.b16 %v311
    %v686 = vunpack.c.h.b16 %v311
    %v687 = vunpack.c.l.b16 %v312
    %v688 = vunpack.c.h.b16 %v312
    %v689 = vunpack.c.l.b16 %v313
    %v690 = vunpack.c.h.b16 %v313
    %v691 = vunpack.c.l.b16 %v314
    %v692 = vunpack.c.h.b16 %v314
    %v693 = vunpack.c.l.b16 %v315
    %v694 = vunpack.c.h.b16 %v315
    %v695 = vunpack.c.l.b16 %v316
    %v696 = vunpack.c.h.b16 %v316
    %v697 = vunpack.c.l.b16 %v317
    %v698 = vunpack.c.h.b16 %v317
    %v699 = vunpack.c.l.b16 %v318
    %v700 = vunpack.c.h.b16 %v318
    %v701 = vunpack.c.l.b16 %v319
    %v702 = vunpack.c.h.b16 %v319
    %v703 = vunpack.c.l.b16 %v320
    %v704 = vunpack.c.h.b16 %v320
    %v705 = vunpack.c.l.b16 %v321
    %v706 = vunpack.c.h.b16 %v321
    %v707 = vunpack.c.l.b16 %v322
    %v708 = vunpack.c.h.b16 %v322
    %v709 = vunpack.c.l.b16 %v323
    %v710 = vunpack.c.h.b16 %v323
    %v711 = vunpack.c.l.b16 %v324
    %v712 = vunpack.c.h.b16 %v324
    %v713 = vunpack.c.l.b16 %v325
    %v714 = vunpack.c.h.b16 %v325
    %v715 = vunpack.c.l.b16 %v326
    %v716 = vunpack.c.h.b16 %v326
    %v717 = vunpack.c.l.b16 %v327
    %v718 = vunpack.c.h.b16 %v327
    %v719 = vunpack.c.l.b16 %v328
    %v720 = vunpack.c.h.b16 %v328
    %v721 = vunpack.c.l.b16 %v329
    %v722 = vunpack.c.h.b16 %v329
    %v723 = vunpack.c.l.b16 %v330
    %v724 = vunpack.c.h.b16 %v330
    %v725 = vunpack.c.l.b16 %v331
    %v726 = vunpack.c.h.b16 %v331
    %v727 = vunpack.c.l.b16 %v332
    %v728 = vunpack.c.h.b16 %v332
    %v729 = vunpack.c.l.b16 %v333
    %v730 = vunpack.c.h.b16 %v333
    %v731 = vunpack.c.l.b16 %v334
    %v732 = vunpack.c.h.b16 %v334
    %v733 = vunpack.c.l.b16 %v335
    %v734 = vunpack.c.h.b16 %v335
    %v735 = vunpack.c.l.b16 %v336
    %v736 = vunpack.c.h.b16 %v336
    %v737 = vunpack.c.l.b16 %v337
    %v738 = vunpack.c.h.b16 %v337
    %v739 = vunpack.c.l.b16 %v338
    %v740 = vunpack.c.h.b16 %v338
    %v741 = vunpack.c.l.b16 %v339
    %v742 = vunpack.c.h.b16 %v339
    %v743 = vunpack.c.l.b16 %v340
    %v744 = vunpack.c.h.b16 %v340
    %v745 = vunpack.c.l.b16 %v341
    %v746 = vunpack.c.h.b16 %v341
    %v747 = vunpack.c.l.b16 %v342
    %v748 = vunpack.c.h.b16 %v342
    %v749 = vunpack.c.l.b16 %v343
    %v750 = vunpack.c.h.b16 %v343
    %v751 = vunpack.c.l.b16 %v344
    %v752 = vunpack.c.h.b16 %v344
    %v753 = vunpack.c.l.b16 %v345
    %v754 = vunpack.c.h.b16 %v345
    %v755 = vunpack.c.l.b16 %v346
    %v756 = vunpack.c.h.b16 %v346
    %v757 = vunpack.c.l.b16 %v347
    %v758 = vunpack.c.h.b16 %v347
    %v759 = vunpack.c.l.b16 %v348
    %v760 = vunpack.c.h.b16 %v348
    %v761 = vunpack.c.l.b16 %v349
    %v762 = vunpack.c.h.b16 %v349
    %v763 = vunpack.c.l.b16 %v350
    %v764 = vunpack.c.h.b16 %v350
    %v765 = vunpack.c.l.b16 %v351
    %v766 = vunpack.c.h.b16 %v351
    %v767 = vunpack.c.l.b16 %v352
    %v768 = vunpack.c.h.b16 %v352
    %v769 = vunpack.c.l.b16 %v353
    %v770 = vunpack.c.h.b16 %v353
    %v771 = vunpack.c.l.b16 %v354
    %v772 = vunpack.c.h.b16 %v354
    %v773 = vunpack.c.l.b16 %v355
    %v774 = vunpack.c.h.b16 %v355
    %v775 = vunpack.c.l.b16 %v356
    %v776 = vunpack.c.h.b16 %v356
    %v777 = vunpack.c.l.b16 %v357
    %v778 = vunpack.c.h.b16 %v357
    %v779 = vunpack.c.l.b16 %v358
    %v780 = vunpack.c.h.b16 %v358
    %v781 = vunpack.c.l.b16 %v359
    %v782 = vunpack.c.h.b16 %v359
    %v783 = vunpack.c.l.b16 %v360
    %v784 = vunpack.c.h.b16 %v360
    %v785 = vunpack.c.l.b16 %v361
    %v786 = vunpack.c.h.b16 %v361
    %v787 = vunpack.c.l.b16 %v362
    %v788 = vunpack.c.h.b16 %v362
    %v789 = vpack.c.b16 %v541, %v533
    %v790 = vpack.c.b16 %v542, %v534
    %v791 = vpack.c.b16 %v543, %v535
    %v792 = vpack.c.b16 %v544, %v536
    %v793 = vpack.c.b16 %v545, %v537
    %v794 = vpack.c.b16 %v546, %v538
    %v795 = vpack.c.b16 %v547, %v539
    %v796 = vpack.c.b16 %v548, %v540
    %v797 = vpack.c.b16 %v557, %v549
    %v798 = vpack.c.b16 %v558, %v550
    %v799 = vpack.c.b16 %v559, %v551
    %v800 = vpack.c.b16 %v560, %v552
    %v801 = vpack.c.b16 %v561, %v553
    %v802 = vpack.c.b16 %v562, %v554
    %v803 = vpack.c.b16 %v563, %v555
    %v804 = vpack.c.b16 %v564, %v556
    %v805 = vpack.c.b16 %v573, %v565
    %v806 = vpack.c.b16 %v574, %v566
    %v807 = vpack.c.b16 %v575, %v567
    %v808 = vpack.c.b16 %v576, %v568
    %v809 = vpack.c.b16 %v577, %v569
    %v810 = vpack.c.b16 %v578, %v570
    %v811 = vpack.c.b16 %v579, %v571
    %v812 = vpack.c.b16 %v580, %v572
    %v813 = vpack.c.b16 %v589, %v581
    %v814 = vpack.c.b16 %v590, %v582
    %v815 = vpack.c.b16 %v591, %v583
    %v816 = vpack.c.b16 %v592, %v584
    %v817 = vpack.c.b16 %v593, %v585
    %v818 = vpack.c.b16 %v594, %v586
    %v819 = vpack.c.b16 %v595, %v587
    %v820 = vpack.c.b16 %v596, %v588
    %v821 = vpack.c.b16 %v605, %v597
    %v822 = vpack.c.b16 %v606, %v598
    %v823 = vpack.c.b16 %v607, %v599
    %v824 = vpack.c.b16 %v608, %v600
    %v825 = vpack.c.b16 %v609, %v601
    %v826 = vpack.c.b16 %v610, %v602
    %v827 = vpack.c.b16 %v611, %v603
    %v828 = vpack.c.b16 %v612, %v604
    %v829 = vpack.c.b16 %v621, %v613
    %v830 = vpack.c.b16 %v622, %v614
    %v831 = vpack.c.b16 %v623, %v615
    %v832 = vpack.c.b16 %v624, %v616
    %v833 = vpack.c.b16 %v625, %v617
    %v834 = vpack.c.b16 %v626, %v618
    %v835 = vpack.c.b16 %v627, %v619
    %v836 = vpack.c.b16 %v628, %v620
    %v837 = vpack.c.b16 %v637, %v629
    %v838 = vpack.c.b16 %v638, %v630
    %v839 = vpack.c.b16 %v639, %v631
    %v840 = vpack.c.b16 %v640, %v632
    %v841 = vpack.c.b16 %v641, %v633
    %v842 = vpack.c.b16 %v642, %v634
    %v843 = vpack.c.b16 %v643, %v635
    %v844 = vpack.c.b16 %v644, %v636
    %v845 = vpack.c.b16 %v653, %v645
    %v846 = vpack.c.b16 %v654, %v646
    %v847 = vpack.c.b16 %v655, %v647
    %v848 = vpack.c.b16 %v656, %v648
    %v849 = vpack.c.b16 %v657, %v649
    %v850 = vpack.c.b16 %v658, %v650
    %v851 = vpack.c.b16 %v659, %v651
    %v852 = vpack.c.b16 %v660, %v652
    %v853 = vpack.c.b16 %v669, %v661
    %v854 = vpack.c.b16 %v670, %v662
    %v855 = vpack.c.b16 %v671, %v663
    %v856 = vpack.c.b16 %v672, %v664
    %v857 = vpack.c.b16 %v673, %v665
    %v858 = vpack.c.b16 %v674, %v666
    %v859 = vpack.c.b16 %v675, %v667
    %v860 = vpack.c.b16 %v676, %v668
    %v861 = vpack.c.b16 %v685, %v677
    %v862 = vpack.c.b16 %v686, %v678
    %v863 = vpack.c.b16 %v687, %v679
    %v864 = vpack.c.b16 %v688, %v680
    %v865 = vpack.c.b16 %v689, %v681
    %v866 = vpack.c.b16 %v690, %v682
    %v867 = vpack.c.b16 %v691, %v683
    %v868 = vpack.c.b16 %v692, %v684
    %v869 = vpack.c.b16 %v701, %v693
    %v870 = vpack.c.b16 %v702, %v694
    %v871 = vpack.c.b16 %v703, %v695
    %v872 = vpack.c.b16 %v704, %v696
    %v873 = vpack.c.b16 %v705, %v697
    %v874 = vpack.c.b16 %v706, %v698
    %v875 = vpack.c.b16 %v707, %v699
    %v876 = vpack.c.b16 %v708, %v700
    %v877 = vpack.c.b16 %v717, %v709
    %v878 = vpack.c.b16 %v718, %v710
    %v879 = vpack.c.b16 %v719, %v711
    %v880 = vpack.c.b16 %v720, %v712
    %v881 = vpack.c.b16 %v721, %v713
    %v882 = vpack.c.b16 %v722, %v714
    %v883 = vpack.c.b16 %v723, %v715
    %v884 = vpack.c.b16 %v724, %v716
    %v885 = vpack.c.b16 %v733, %v725
    %v886 = vpack.c.b16 %v734, %v726
    %v887 = vpack.c.b16 %v735, %v727
    %v888 = vpack.c.b16 %v736, %v728
    %v889 = vpack.c.b16 %v737, %v729
    %v890 = vpack.c.b16 %v738, %v730
    %v891 = vpack.c.b16 %v739, %v731
    %v892 = vpack.c.b16 %v740, %v732
    %v893 = vpack.c.b16 %v749, %v741
    %v894 = vpack.c.b16 %v750, %v742
    %v895 = vpack.c.b16 %v751, %v743
    %v896 = vpack.c.b16 %v752, %v744
    %v897 = vpack.c.b16 %v753, %v745
    %v898 = vpack.c.b16 %v754, %v746
    %v899 = vpack.c.b16 %v755, %v747
    %v900 = vpack.c.b16 %v756, %v748
    %v901 = vpack.c.b16 %v765, %v757
    %v902 = vpack.c.b16 %v766, %v758
    %v903 = vpack.c.b16 %v767, %v759
    %v904 = vpack.c.b16 %v768, %v760
    %v905 = vpack.c.b16 %v769, %v761
    %v906 = vpack.c.b16 %v770, %v762
    %v907 = vpack.c.b16 %v771, %v763
    %v908 = vpack.c.b16 %v772, %v764
    %v909 = vpack.c.b16 %v781, %v773
    %v910 = vpack.c.b16 %v782, %v774
    %v911 = vpack.c.b16 %v783, %v775
    %v912 = vpack.c.b16 %v784, %v776
    %v913 = vpack.c.b16 %v785, %v777
    %v914 = vpack.c.b16 %v786, %v778
    %v915 = vpack.c.b16 %v787, %v779
    %v916 = vpack.c.b16 %v788, %v780
    %1045 = vmatprep.subr.bf16.mxu0 %v790
    %1046 = vmatpush1.bf16.msra.mxu0 %v789
    %1047 = vmatprep.subr.bf16.mxu0 %v798
    %1048 = vmatpush1.bf16.msra.mxu0 %v797
    %1049 = vmatprep.subr.bf16.mxu0 %v806
    %1050 = vmatpush1.bf16.msra.mxu0 %v805
    %1051 = vmatprep.subr.bf16.mxu0 %v814
    %1052 = vmatpush1.bf16.msra.mxu0 %v813
    %1053 = vmatprep.subr.bf16.mxu0 %v822
    %1054 = vmatpush1.bf16.msra.mxu0 %v821
    %1055 = vmatprep.subr.bf16.mxu0 %v830
    %1056 = vmatpush1.bf16.msra.mxu0 %v829
    %1057 = vmatprep.subr.bf16.mxu0 %v838
    %1058 = vmatpush1.bf16.msra.mxu0 %v837
    %1059 = vmatprep.subr.bf16.mxu0 %v846
    %1060 = vmatpush1.bf16.msra.mxu0 %v845
    %1061 = vmatprep.subr.bf16.mxu0 %v854
    %1062 = vmatpush1.bf16.msra.mxu0 %v853
    %1063 = vmatprep.subr.bf16.mxu0 %v862
    %1064 = vmatpush1.bf16.msra.mxu0 %v861
    %1065 = vmatprep.subr.bf16.mxu0 %v870
    %1066 = vmatpush1.bf16.msra.mxu0 %v869
    %1067 = vmatprep.subr.bf16.mxu0 %v878
    %1068 = vmatpush1.bf16.msra.mxu0 %v877
    %1069 = vmatprep.subr.bf16.mxu0 %v886
    %1070 = vmatpush1.bf16.msra.mxu0 %v885
    %1071 = vmatprep.subr.bf16.mxu0 %v894
    %1072 = vmatpush1.bf16.msra.mxu0 %v893
    %1073 = vmatprep.subr.bf16.mxu0 %v902
    %1074 = vmatpush1.bf16.msra.mxu0 %v901
    %1075 = vmatprep.subr.bf16.mxu0 %v910
    %1076 = vmatpush1.bf16.msra.mxu0 %v909
    %1077 = vmatprep.mubr.bf16.mxu0 %v234
    %1078 = vmatmul.mubr.bf16.gmra.mrb[0].mxu0 %v233
    %v1079 = vpop.f32.mrb[0].mxu0
    %v1080 = vadd.f32 %v368, %v1079
    %v1081 = vpop.f32.mrb[0].mxu0
    %v1082 = vadd.f32 %v372, %v1081
    %v1083 = vpop.f32.mrb[0].mxu0
    %v1084 = vpop.f32.mrb[0].mxu0
    %1085 = vdwg.mxu0
    %1086 = vmatprep.subr.bf16.mxu0 %v792
    %1087 = vmatpush1.bf16.msra.mxu0 %v791
    %1088 = vmatprep.subr.bf16.mxu0 %v800
    %1089 = vmatpush1.bf16.msra.mxu0 %v799
    %1090 = vmatprep.subr.bf16.mxu0 %v808
    %1091 = vmatpush1.bf16.msra.mxu0 %v807
    %1092 = vmatprep.subr.bf16.mxu0 %v816
    %1093 = vmatpush1.bf16.msra.mxu0 %v815
    %1094 = vmatprep.subr.bf16.mxu0 %v824
    %1095 = vmatpush1.bf16.msra.mxu0 %v823
    %1096 = vmatprep.subr.bf16.mxu0 %v832
    %1097 = vmatpush1.bf16.msra.mxu0 %v831
    %1098 = vmatprep.subr.bf16.mxu0 %v840
    %1099 = vmatpush1.bf16.msra.mxu0 %v839
    %1100 = vmatprep.subr.bf16.mxu0 %v848
    %1101 = vmatpush1.bf16.msra.mxu0 %v847
    %1102 = vmatprep.subr.bf16.mxu0 %v856
    %1103 = vmatpush1.bf16.msra.mxu0 %v855
    %1104 = vmatprep.subr.bf16.mxu0 %v864
    %1105 = vmatpush1.bf16.msra.mxu0 %v863
    %1106 = vmatprep.subr.bf16.mxu0 %v872
    %1107 = vmatpush1.bf16.msra.mxu0 %v871
    %1108 = vmatprep.subr.bf16.mxu0 %v880
    %1109 = vmatpush1.bf16.msra.mxu0 %v879
    %1110 = vmatprep.subr.bf16.mxu0 %v888
    %1111 = vmatpush1.bf16.msra.mxu0 %v887
    %1112 = vmatprep.subr.bf16.mxu0 %v896
    %1113 = vmatpush1.bf16.msra.mxu0 %v895
    %1114 = vmatprep.subr.bf16.mxu0 %v904
    %1115 = vmatpush1.bf16.msra.mxu0 %v903
    %1116 = vmatprep.subr.bf16.mxu0 %v912
    %1117 = vmatpush1.bf16.msra.mxu0 %v911
    %1118 = vmatprep.mubr.bf16.mxu0 %v234
    %1119 = vmatmul.mubr.bf16.gmra.mrb[0].mxu0 %v233
    %v1120 = vpop.f32.mrb[0].mxu0
    %v1121 = vadd.f32 %v376, %v1120
    %v1122 = vpop.f32.mrb[0].mxu0
    %v1123 = vadd.f32 %v380, %v1122
    %v1124 = vpop.f32.mrb[0].mxu0
    %v1125 = vpop.f32.mrb[0].mxu0
    %1126 = vdwg.mxu0
    %1127 = vmatprep.subr.bf16.mxu0 %v794
    %1128 = vmatpush1.bf16.msra.mxu0 %v793
    %1129 = vmatprep.subr.bf16.mxu0 %v802
    %1130 = vmatpush1.bf16.msra.mxu0 %v801
    %1131 = vmatprep.subr.bf16.mxu0 %v810
    %1132 = vmatpush1.bf16.msra.mxu0 %v809
    %1133 = vmatprep.subr.bf16.mxu0 %v818
    %1134 = vmatpush1.bf16.msra.mxu0 %v817
    %1135 = vmatprep.subr.bf16.mxu0 %v826
    %1136 = vmatpush1.bf16.msra.mxu0 %v825
    %1137 = vmatprep.subr.bf16.mxu0 %v834
    %1138 = vmatpush1.bf16.msra.mxu0 %v833
    %1139 = vmatprep.subr.bf16.mxu0 %v842
    %1140 = vmatpush1.bf16.msra.mxu0 %v841
    %1141 = vmatprep.subr.bf16.mxu0 %v850
    %1142 = vmatpush1.bf16.msra.mxu0 %v849
    %1143 = vmatprep.subr.bf16.mxu0 %v858
    %1144 = vmatpush1.bf16.msra.mxu0 %v857
    %1145 = vmatprep.subr.bf16.mxu0 %v866
    %1146 = vmatpush1.bf16.msra.mxu0 %v865
    %1147 = vmatprep.subr.bf16.mxu0 %v874
    %1148 = vmatpush1.bf16.msra.mxu0 %v873
    %1149 = vmatprep.subr.bf16.mxu0 %v882
    %1150 = vmatpush1.bf16.msra.mxu0 %v881
    %1151 = vmatprep.subr.bf16.mxu0 %v890
    %1152 = vmatpush1.bf16.msra.mxu0 %v889
    %1153 = vmatprep.subr.bf16.mxu0 %v898
    %1154 = vmatpush1.bf16.msra.mxu0 %v897
    %1155 = vmatprep.subr.bf16.mxu0 %v906
    %1156 = vmatpush1.bf16.msra.mxu0 %v905
    %1157 = vmatprep.subr.bf16.mxu0 %v914
    %1158 = vmatpush1.bf16.msra.mxu0 %v913
    %1159 = vmatprep.mubr.bf16.mxu0 %v234
    %1160 = vmatmul.mubr.bf16.gmra.mrb[0].mxu0 %v233
    %v1161 = vpop.f32.mrb[0].mxu0
    %v1162 = vadd.f32 %v384, %v1161
    %v1163 = vpop.f32.mrb[0].mxu0
    %v1164 = vadd.f32 %v388, %v1163
    %v1165 = vpop.f32.mrb[0].mxu0
    %v1166 = vpop.f32.mrb[0].mxu0
    %1167 = vdwg.mxu0
    %1168 = vmatprep.subr.bf16.mxu0 %v796
    %1169 = vmatpush1.bf16.msra.mxu0 %v795
    %1170 = vmatprep.subr.bf16.mxu0 %v804
    %1171 = vmatpush1.bf16.msra.mxu0 %v803
    %1172 = vmatprep.subr.bf16.mxu0 %v812
    %1173 = vmatpush1.bf16.msra.mxu0 %v811
    %1174 = vmatprep.subr.bf16.mxu0 %v820
    %1175 = vmatpush1.bf16.msra.mxu0 %v819
    %1176 = vmatprep.subr.bf16.mxu0 %v828
    %1177 = vmatpush1.bf16.msra.mxu0 %v827
    %1178 = vmatprep.subr.bf16.mxu0 %v836
    %1179 = vmatpush1.bf16.msra.mxu0 %v835
    %1180 = vmatprep.subr.bf16.mxu0 %v844
    %1181 = vmatpush1.bf16.msra.mxu0 %v843
    %1182 = vmatprep.subr.bf16.mxu0 %v852
    %1183 = vmatpush1.bf16.msra.mxu0 %v851
    %1184 = vmatprep.subr.bf16.mxu0 %v860
    %1185 = vmatpush1.bf16.msra.mxu0 %v859
    %1186 = vmatprep.subr.bf16.mxu0 %v868
    %1187 = vmatpush1.bf16.msra.mxu0 %v867
    %1188 = vmatprep.subr.bf16.mxu0 %v876
    %1189 = vmatpush1.bf16.msra.mxu0 %v875
    %1190 = vmatprep.subr.bf16.mxu0 %v884
    %1191 = vmatpush1.bf16.msra.mxu0 %v883
    %1192 = vmatprep.subr.bf16.mxu0 %v892
    %1193 = vmatpush1.bf16.msra.mxu0 %v891
    %1194 = vmatprep.subr.bf16.mxu0 %v900
    %1195 = vmatpush1.bf16.msra.mxu0 %v899
    %1196 = vmatprep.subr.bf16.mxu0 %v908
    %1197 = vmatpush1.bf16.msra.mxu0 %v907
    %1198 = vmatprep.subr.bf16.mxu0 %v916
    %1199 = vmatpush1.bf16.msra.mxu0 %v915
    %1200 = vmatprep.mubr.bf16.mxu0 %v234
    %1201 = vmatmul.mubr.bf16.gmra.mrb[0].mxu0 %v233
    %v1202 = vpop.f32.mrb[0].mxu0
    %v1203 = vadd.f32 %v392, %v1202
    %v1204 = vpop.f32.mrb[0].mxu0
    %v1205 = vadd.f32 %v396, %v1204
    %v1206 = vpop.f32.mrb[0].mxu0
    %v1207 = vpop.f32.mrb[0].mxu0
    %1208 = vdwg.mxu0
    %v1209 = vtanh.pop %v1080
    %v1210 = vtanh.pop %v1082
    %v1211 = vtanh.pop %v1121
    %v1212 = vtanh.pop %v1123
    %v1213 = vtanh.pop %v1162
    %v1214 = vtanh.pop %v1164
    %v1215 = vtanh.pop %v1203
    %v1216 = vtanh.pop %v1205
    %1217 = vst [vmem:[%s7] sm:$0xff] %v1209
    %1218 = vst [vmem:[%s7 + $0x8] sm:$0xff] %v1210
    %1219 = vst [vmem:[%s7 + $0x10] sm:$0xff] %v1211
    %1220 = vst [vmem:[%s7 + $0x18] sm:$0xff] %v1212
    %1221 = vst [vmem:[%s7 + $0x20] sm:$0xff] %v1213
    %1222 = vst [vmem:[%s7 + $0x28] sm:$0xff] %v1214
    %1223 = vst [vmem:[%s7 + $0x30] sm:$0xff] %v1215
    %1224 = vst [vmem:[%s7 + $0x38] sm:$0xff] %v1216
    // Predicated region
    $region38: #{generator_forward.1} parent=1 // pred_check
      _
    $region39: #{generator_forward.1} parent=1 // pred_check_branch
      %1226 = sbr.rel (0) target = $region41
    $region40: #{generator_forward.1} parent=1 // pred_region
      _
    $region41: #{generator_forward.1} parent=1 // pred_fallthru
      _
    // Predicated region
    $region42: #{generator_forward.1} parent=1 // pred_check
      _
    $region43: #{generator_forward.1} parent=1 // pred_check_branch
      %1228 = sbr.rel (0) target = $region45
    $region44: #{generator_forward.1} parent=1 // pred_region
      _
    $region45: #{generator_forward.1} parent=1 // pred_fallthru
      _
    %1229 = vsyncpa [#allocation3], 1
    %1230 = vsyncpa [#allocation5], 1

</llo_original>
